<compile_context>
chip_gen: v5e
topology: v5e:2x2
jax: 0.10.0
libtpu: 0.0.40
codegen_flags: <defaults>
</compile_context>

<pallas_src>
import math

import jax
import jax.numpy as jnp
from jax.experimental import pallas as pl
from jax.experimental.pallas import tpu as pltpu


def _mlp(seq, img, w1s_ref, w1i_ref, b1_ref, w2_ref, b2_ref):
    """relu(relu([seq|img] @ W1 + b1) @ W2 + b2) with f32 accumulation.

    W1 is pre-split (seq part / img part) so no in-kernel lane concatenation
    is needed: two MXU pushes accumulate into one f32 result.
    """
    cdt = w1s_ref.dtype
    h = jnp.dot(seq.astype(cdt), w1s_ref[...],
                preferred_element_type=jnp.float32)
    h = h + jnp.dot(img.astype(cdt), w1i_ref[...],
                    preferred_element_type=jnp.float32)
    h = jnp.maximum(h + b1_ref[...], 0.0)
    # TODO(synk): if h1 ever becomes large (>=2048), chunk the hidden dim and
    # accumulate y += h_chunk @ W2[chunk] to cap the live f32 intermediate.
    y = jnp.dot(h.astype(w2_ref.dtype), w2_ref[...],
                preferred_element_type=jnp.float32)
    return jnp.maximum(y + b2_ref[...], 0.0)


def _fusion_kernel_full(seq_ref, img_ref, w1s_ref, w1i_ref, b1_ref,
                        w2_ref, b2_ref, out_ref):
    """One batch tile; writes cat(seq, img, y) into column slices of out_ref."""
    seq = seq_ref[...]
    img = img_ref[...]
    y = _mlp(seq, img, w1s_ref, w1i_ref, b1_ref, w2_ref, b2_ref)
    sd = seq_ref.shape[1]
    im = img_ref.shape[1]
    out_ref[:, :sd] = seq.astype(out_ref.dtype)
    out_ref[:, sd:sd + im] = img.astype(out_ref.dtype)
    out_ref[:, sd + im:] = y.astype(out_ref.dtype)


def _fusion_kernel_y(seq_ref, img_ref, w1s_ref, w1i_ref, b1_ref,
                     w2_ref, b2_ref, y_ref):
    """Fallback kernel: emits y only; wrapper concatenates in XLA."""
    y = _mlp(seq_ref[...], img_ref[...], w1s_ref, w1i_ref, b1_ref,
             w2_ref, b2_ref)
    y_ref[...] = y.astype(y_ref.dtype)


def dnn_cat_ret_cat_all_fusion(seq, img, params, *, block_b=None,
                               weights_dtype=jnp.bfloat16):
    """params = (W1 (in,h1), b1 (1,h1), W2 (h1,h2), b2 (1,h2)).

    Weights are stored transposed vs torch.nn.Linear, i.e. (in_dim, out_dim).
    Returns cat(seq, img, relu(relu(cat(seq,img)@W1+b1)@W2+b2), dim=1).
    Norm is Identity (dnn_norm_type=None); Dropout is an eval-mode no-op.
    """
    w1, b1, w2, b2 = params
    B, seq_dim = seq.shape
    img_dim = img.shape[1]
    in_dim = seq_dim + img_dim
    h1 = w1.shape[1]
    h2 = w2.shape[1]
    total = in_dim + h2
    out_dtype = seq.dtype

    # Pre-split W1 (no in-kernel concat) and cast weights to the MXU-native
    # dtype (bf16 by default); biases stay f32, accumulation stays f32.
    wdt = w1.dtype if weights_dtype is None else weights_dtype
    w1_seq = w1[:seq_dim, :].astype(wdt)
    w1_img = w1[seq_dim:, :].astype(wdt)
    w2c = w2.astype(wdt)
    b1c = b1.astype(jnp.float32)
    b2c = b2.astype(jnp.float32)

    in_bytes = seq.dtype.itemsize
    out_bytes = out_dtype.itemsize
    w_bytes = w1_seq.dtype.itemsize

    # dtype-dependent sublane multiple for the batch (second-minor) axis.
    sub = {4: 8, 2: 16, 1: 32}.get(min(in_bytes, out_bytes), 8)

    # --- batch tile selection -------------------------------------------------
    row_bytes = in_dim * in_bytes + total * out_bytes
    if block_b is None:
        # Target ~2 MiB of HBM traffic per grid step (per-step overhead ~0.35us).
        tb = max(sub, (2 * 1024 * 1024 + row_bytes - 1) // row_bytes)
    else:
        tb = block_b
    tb = min(tb, B)
    # Keep >= 2 parallel grid steps when the batch is big enough (v7x: 2 TCs).
    if B >= 2 * sub and tb > (B + 1) // 2:
        tb = (B + 1) // 2
    if tb != B and tb % sub != 0:
        tb = max(sub, (tb // sub) * sub)

    # --- VMEM budget (double-buffered I/O tiles + single-buffered weights) ---
    weight_vmem = ((w1_seq.size + w1_img.size + w2c.size) * w_bytes
                   + (b1c.size + b2c.size) * 4)

    def tile_vmem(t):
        io = 2 * t * in_dim * in_bytes + 2 * t * total * out_bytes
        inter = t * h1 * 4 + t * h2 * 4          # f32 h and y intermediates
        return io + inter

    budget = 40 * 1024 * 1024                    # fits v7x's 64 MiB w/ headroom
    while tb > sub and weight_vmem + tile_vmem(tb) > budget:
        tb = max(sub, ((tb // 2) // sub) * sub)

    vmem_need = weight_vmem + tile_vmem(tb)
    vmem_limit = int(min(60 * 1024 * 1024,
                         max(vmem_need + (4 << 20), 32 * 1024 * 1024)))

    grid = (pl.cdiv(B, tb),)

    cost = pl.CostEstimate(
        flops=2 * B * (in_dim * h1 + h1 * h2),
        transcendentals=0,
        bytes_accessed=(B * in_dim * in_bytes + B * total * out_bytes
                        + (w1_seq.size + w1_img.size + w2c.size) * w_bytes
                        + (b1c.size + b2c.size) * 4),
    )

    def batch_spec(feat):
        return pl.BlockSpec((tb, feat), lambda i: (i, 0))

    def build(fused_out, single_buffer_weights):
        if single_buffer_weights:
            def wspec(a):
                return pl.BlockSpec(a.shape, lambda i: (0, 0),
                                    pipeline_mode=pl.Buffered(1))
        else:
            def wspec(a):
                return pl.BlockSpec(a.shape, lambda i: (0, 0))
        kernel = _fusion_kernel_full if fused_out else _fusion_kernel_y
        out_cols = total if fused_out else h2
        return pl.pallas_call(
            kernel,
            out_shape=jax.ShapeDtypeStruct((B, out_cols), out_dtype),
            grid=grid,
            in_specs=[batch_spec(seq_dim), batch_spec(img_dim),
                      wspec(w1_seq), wspec(w1_img), wspec(b1c),
                      wspec(w2c), wspec(b2c)],
            out_specs=batch_spec(out_cols),
            compiler_params=pltpu.CompilerParams(
                dimension_semantics=("parallel",),
                vmem_limit_bytes=vmem_limit),
            cost_estimate=cost,
        )

    args = (seq, img, w1_seq, w1_img, b1c, w2c, b2c)

    # Preferred config first; degrade gracefully if a feature isn't available
    # in the local Pallas/Mosaic version (the last config is the known-good
    # previous design: y-only output + XLA concat).
    configs = ((True, True), (True, False), (False, False))
    for fused_out, buffered in configs:
        try:
            out = jax.block_until_ready(build(fused_out, buffered)(*args))
        except Exception:
            if (fused_out, buffered) == configs[-1]:
                raise
            continue
        if fused_out:
            return out
        return jnp.concatenate([seq, img, out], axis=1)

    # TODO(synk): implement 'bn'/'in' normalization and training-mode dropout
    # if a non-eval / non-None-norm configuration is ever required; batch-wise
    # norms would also need masking of padded rows in partial batch tiles.


def init_params(key, input_dim, hidden_dims):
    """torch.nn.Linear-style init: U(-1/sqrt(fan_in), 1/sqrt(fan_in))."""
    dims = [input_dim] + list(hidden_dims)
    params = []
    for i in range(len(hidden_dims)):
        key, kw, kb = jax.random.split(key, 3)
        bound = 1.0 / math.sqrt(dims[i])
        w = jax.random.uniform(kw, (dims[i], dims[i + 1]),
                               minval=-bound, maxval=bound, dtype=jnp.float32)
        b = jax.random.uniform(kb, (1, dims[i + 1]),
                               minval=-bound, maxval=bound, dtype=jnp.float32)
        params += [w, b]
    return tuple(params)


def _reference(seq, img, params):
    w1, b1, w2, b2 = params
    x = jnp.concatenate([seq, img], axis=1)
    h = jnp.maximum(x @ w1 + b1, 0.0)
    y = jnp.maximum(h @ w2 + b2, 0.0)
    return jnp.concatenate([seq, img, y], axis=1)


if __name__ == "__main__":
    # Small shapes consistent with the module.
    seq_dim = 8                  # feature_dims['seq']
    img_dim = 16                 # feature_dims['img']
    input_dim = seq_dim + img_dim
    dnn_hidden_dims = [32, 16]   # dnn_activations=['relu','relu']
    total = seq_dim + img_dim + dnn_hidden_dims[-1]

    key = jax.random.PRNGKey(0)
    k_seq, k_img, k_par = jax.random.split(key, 3)
    params = init_params(k_par, input_dim, dnn_hidden_dims)

    ok = True

    # Case 1: tiny batch, default bf16 weights, single tile (tb == B).
    B = 2
    seq_f = jax.random.normal(k_seq, (B, seq_dim), dtype=jnp.float32)
    img_f = jax.random.normal(k_img, (B, img_dim), dtype=jnp.float32)
    out = jax.block_until_ready(dnn_cat_ret_cat_all_fusion(seq_f, img_f, params))
    ref = _reference(seq_f, img_f, params)
    ok &= out.shape == (B, total)
    ok &= bool(jnp.allclose(out[:, :input_dim], ref[:, :input_dim]))  # exact copy
    ok &= bool(jnp.allclose(out, ref, atol=5e-2, rtol=5e-2))          # bf16 weights

    # Case 2: tiled grid with a partial last tile, f32 weights (tight check).
    B2 = 70
    k2a, k2b = jax.random.split(jax.random.PRNGKey(1))
    seq2 = jax.random.normal(k2a, (B2, seq_dim), dtype=jnp.float32)
    img2 = jax.random.normal(k2b, (B2, img_dim), dtype=jnp.float32)
    out2 = jax.block_until_ready(
        dnn_cat_ret_cat_all_fusion(seq2, img2, params, block_b=16,
                                   weights_dtype=None))
    ref2 = _reference(seq2, img2, params)
    ok &= out2.shape == (B2, total)
    ok &= bool(jnp.allclose(out2, ref2, atol=1e-5, rtol=1e-5))

    # Case 3: auto tile selection, >= 2 parallel grid steps (v7x TC sharing).
    B3 = 1024
    k3a, k3b = jax.random.split(jax.random.PRNGKey(2))
    seq3 = jax.random.normal(k3a, (B3, seq_dim), dtype=jnp.float32)
    img3 = jax.random.normal(k3b, (B3, img_dim), dtype=jnp.float32)
    out3 = jax.block_until_ready(dnn_cat_ret_cat_all_fusion(seq3, img3, params))
    ref3 = _reference(seq3, img3, params)
    ok &= out3.shape == (B3, total)
    ok &= bool(jnp.allclose(out3, ref3, atol=5e-2, rtol=5e-2))

    assert ok
    print("KERNEL_OK")
</pallas_src>

<mosaic_0001>
module attributes {stable_mosaic.version = 11 : i64} {
  func.func @_fusion_kernel_full(%arg0: i32, %arg1: memref<2x8xf32, #tpu.memory_space<vmem>>, %arg2: memref<2x16xf32, #tpu.memory_space<vmem>>, %arg3: memref<8x32xbf16, #tpu.memory_space<vmem>>, %arg4: memref<16x32xbf16, #tpu.memory_space<vmem>>, %arg5: memref<1x32xf32, #tpu.memory_space<vmem>>, %arg6: memref<32x16xbf16, #tpu.memory_space<vmem>>, %arg7: memref<1x16xf32, #tpu.memory_space<vmem>>, %arg8: memref<2x40xf32, #tpu.memory_space<vmem>>) attributes {dimension_semantics = [#tpu.dimension_semantics<parallel>], iteration_bounds = array<i64: 1>, scalar_prefetch = 0 : i64, scratch_operands = 0 : i64, tpu.core_type = #tpu.core_type<tc>, window_params = [{transform_indices = @transform_0, window_bounds = array<i64: 2, 8>}, {transform_indices = @transform_1, window_bounds = array<i64: 2, 16>}, {pipeline_mode = #tpu.pipeline_mode<synchronous>, transform_indices = @transform_2, window_bounds = array<i64: 8, 32>}, {pipeline_mode = #tpu.pipeline_mode<synchronous>, transform_indices = @transform_3, window_bounds = array<i64: 16, 32>}, {pipeline_mode = #tpu.pipeline_mode<synchronous>, transform_indices = @transform_4, window_bounds = array<i64: 1, 32>}, {pipeline_mode = #tpu.pipeline_mode<synchronous>, transform_indices = @transform_5, window_bounds = array<i64: 32, 16>}, {pipeline_mode = #tpu.pipeline_mode<synchronous>, transform_indices = @transform_6, window_bounds = array<i64: 1, 16>}, {transform_indices = @transform_7, window_bounds = array<i64: 2, 40>}]} {
    %c0 = arith.constant 0 : index
    %c0_0 = arith.constant 0 : index
    %0 = vector.load %arg1[%c0, %c0_0] : memref<2x8xf32, #tpu.memory_space<vmem>>, vector<2x8xf32>
    %c0_1 = arith.constant 0 : index
    %c0_2 = arith.constant 0 : index
    %1 = vector.load %arg2[%c0_1, %c0_2] : memref<2x16xf32, #tpu.memory_space<vmem>>, vector<2x16xf32>
    %2 = arith.truncf %0 : vector<2x8xf32> to vector<2x8xbf16>
    %c0_3 = arith.constant 0 : index
    %c0_4 = arith.constant 0 : index
    %3 = vector.load %arg3[%c0_3, %c0_4] : memref<8x32xbf16, #tpu.memory_space<vmem>>, vector<8x32xbf16>
    %cst = arith.constant dense<0.000000e+00> : vector<2x32xf32>
    %4 = tpu.matmul %2, %3, %cst {dimension_numbers = #tpu.dot_dimension_numbers<[1], [0], [0], [1], [0, 0, 1, 1], [], []>} : vector<2x8xbf16>, vector<8x32xbf16>, vector<2x32xf32> -> vector<2x32xf32>
    %5 = arith.truncf %1 : vector<2x16xf32> to vector<2x16xbf16>
    %c0_5 = arith.constant 0 : index
    %c0_6 = arith.constant 0 : index
    %6 = vector.load %arg4[%c0_5, %c0_6] : memref<16x32xbf16, #tpu.memory_space<vmem>>, vector<16x32xbf16>
    %cst_7 = arith.constant dense<0.000000e+00> : vector<2x32xf32>
    %7 = tpu.matmul %5, %6, %cst_7 {dimension_numbers = #tpu.dot_dimension_numbers<[1], [0], [0], [1], [0, 0, 1, 1], [], []>} : vector<2x16xbf16>, vector<16x32xbf16>, vector<2x32xf32> -> vector<2x32xf32>
    %8 = arith.addf %4, %7 : vector<2x32xf32>
    %c0_8 = arith.constant 0 : index
    %c0_9 = arith.constant 0 : index
    %9 = vector.load %arg5[%c0_8, %c0_9] : memref<1x32xf32, #tpu.memory_space<vmem>>, vector<1x32xf32>
    %10 = vector.broadcast %9 : vector<1x32xf32> to vector<2x32xf32>
    %11 = arith.addf %8, %10 : vector<2x32xf32>
    %cst_10 = arith.constant 0.000000e+00 : f32
    %12 = vector.broadcast %cst_10 : f32 to vector<2x32xf32>
    %13 = arith.maximumf %11, %12 : vector<2x32xf32>
    %14 = arith.truncf %13 : vector<2x32xf32> to vector<2x32xbf16>
    %c0_11 = arith.constant 0 : index
    %c0_12 = arith.constant 0 : index
    %15 = vector.load %arg6[%c0_11, %c0_12] : memref<32x16xbf16, #tpu.memory_space<vmem>>, vector<32x16xbf16>
    %cst_13 = arith.constant dense<0.000000e+00> : vector<2x16xf32>
    %16 = tpu.matmul %14, %15, %cst_13 {dimension_numbers = #tpu.dot_dimension_numbers<[1], [0], [0], [1], [0, 0, 1, 1], [], []>} : vector<2x32xbf16>, vector<32x16xbf16>, vector<2x16xf32> -> vector<2x16xf32>
    %c0_14 = arith.constant 0 : index
    %c0_15 = arith.constant 0 : index
    %17 = vector.load %arg7[%c0_14, %c0_15] : memref<1x16xf32, #tpu.memory_space<vmem>>, vector<1x16xf32>
    %18 = vector.broadcast %17 : vector<1x16xf32> to vector<2x16xf32>
    %19 = arith.addf %16, %18 : vector<2x16xf32>
    %cst_16 = arith.constant 0.000000e+00 : f32
    %20 = vector.broadcast %cst_16 : f32 to vector<2x16xf32>
    %21 = arith.maximumf %19, %20 : vector<2x16xf32>
    %c0_17 = arith.constant 0 : index
    %c0_18 = arith.constant 0 : index
    %22 = vector.load %arg8[%c0_17, %c0_18] : memref<2x40xf32, #tpu.memory_space<vmem>>, vector<2x8xf32>
    tpu.vector_store %arg8[%c0_17, %c0_18], %0 {strides = array<i32>} : memref<2x40xf32, #tpu.memory_space<vmem>>, vector<2x8xf32>,
    %c0_19 = arith.constant 0 : index
    %c8 = arith.constant 8 : index
    %23 = vector.load %arg8[%c0_19, %c8] : memref<2x40xf32, #tpu.memory_space<vmem>>, vector<2x16xf32>
    tpu.vector_store %arg8[%c0_19, %c8], %1 {strides = array<i32>} : memref<2x40xf32, #tpu.memory_space<vmem>>, vector<2x16xf32>,
    %c0_20 = arith.constant 0 : index
    %c24 = arith.constant 24 : index
    %24 = vector.load %arg8[%c0_20, %c24] : memref<2x40xf32, #tpu.memory_space<vmem>>, vector<2x16xf32>
    tpu.vector_store %arg8[%c0_20, %c24], %21 {strides = array<i32>} : memref<2x40xf32, #tpu.memory_space<vmem>>, vector<2x16xf32>,
    return
  }
  func.func @transform_0(%arg0: i32) -> (i32, i32) {
    %c0_i32 = arith.constant 0 : i32
    %c0_i32_0 = arith.constant 0 : i32
    return %arg0, %c0_i32 : i32, i32
  }
  func.func @transform_1(%arg0: i32) -> (i32, i32) {
    %c0_i32 = arith.constant 0 : i32
    %c0_i32_0 = arith.constant 0 : i32
    return %arg0, %c0_i32 : i32, i32
  }
  func.func @transform_2(%arg0: i32) -> (i32, i32) {
    %c0_i32 = arith.constant 0 : i32
    %c0_i32_0 = arith.constant 0 : i32
    %c0_i32_1 = arith.constant 0 : i32
    return %c0_i32, %c0_i32_0 : i32, i32
  }
  func.func @transform_3(%arg0: i32) -> (i32, i32) {
    %c0_i32 = arith.constant 0 : i32
    %c0_i32_0 = arith.constant 0 : i32
    %c0_i32_1 = arith.constant 0 : i32
    return %c0_i32, %c0_i32_0 : i32, i32
  }
  func.func @transform_4(%arg0: i32) -> (i32, i32) {
    %c0_i32 = arith.constant 0 : i32
    %c0_i32_0 = arith.constant 0 : i32
    %c0_i32_1 = arith.constant 0 : i32
    return %c0_i32, %c0_i32_0 : i32, i32
  }
  func.func @transform_5(%arg0: i32) -> (i32, i32) {
    %c0_i32 = arith.constant 0 : i32
    %c0_i32_0 = arith.constant 0 : i32
    %c0_i32_1 = arith.constant 0 : i32
    return %c0_i32, %c0_i32_0 : i32, i32
  }
  func.func @transform_6(%arg0: i32) -> (i32, i32) {
    %c0_i32 = arith.constant 0 : i32
    %c0_i32_0 = arith.constant 0 : i32
    %c0_i32_1 = arith.constant 0 : i32
    return %c0_i32, %c0_i32_0 : i32, i32
  }
  func.func @transform_7(%arg0: i32) -> (i32, i32) {
    %c0_i32 = arith.constant 0 : i32
    %c0_i32_0 = arith.constant 0 : i32
    return %arg0, %c0_i32 : i32, i32
  }
}

module attributes {stable_mosaic.version = 11 : i64} {
  func.func @_fusion_kernel_full(%arg0: i32, %arg1: memref<2x8xf32, #tpu.memory_space<vmem>>, %arg2: memref<2x16xf32, #tpu.memory_space<vmem>>, %arg3: memref<8x32xbf16, #tpu.memory_space<vmem>>, %arg4: memref<16x32xbf16, #tpu.memory_space<vmem>>, %arg5: memref<1x32xf32, #tpu.memory_space<vmem>>, %arg6: memref<32x16xbf16, #tpu.memory_space<vmem>>, %arg7: memref<1x16xf32, #tpu.memory_space<vmem>>, %arg8: memref<2x40xf32, #tpu.memory_space<vmem>>) attributes {dimension_semantics = [#tpu.dimension_semantics<parallel>], iteration_bounds = array<i64: 1>, scalar_prefetch = 0 : i64, scratch_operands = 0 : i64, tpu.core_type = #tpu.core_type<tc>, window_params = [{transform_indices = @transform_0, window_bounds = array<i64: 2, 8>}, {transform_indices = @transform_1, window_bounds = array<i64: 2, 16>}, {pipeline_mode = #tpu.pipeline_mode<synchronous>, transform_indices = @transform_2, window_bounds = array<i64: 8, 32>}, {pipeline_mode = #tpu.pipeline_mode<synchronous>, transform_indices = @transform_3, window_bounds = array<i64: 16, 32>}, {pipeline_mode = #tpu.pipeline_mode<synchronous>, transform_indices = @transform_4, window_bounds = array<i64: 1, 32>}, {pipeline_mode = #tpu.pipeline_mode<synchronous>, transform_indices = @transform_5, window_bounds = array<i64: 32, 16>}, {pipeline_mode = #tpu.pipeline_mode<synchronous>, transform_indices = @transform_6, window_bounds = array<i64: 1, 16>}, {transform_indices = @transform_7, window_bounds = array<i64: 2, 40>}]} {
    %c0 = arith.constant 0 : index
    %c0_0 = arith.constant 0 : index
    %0 = vector.load %arg1[%c0, %c0_0] : memref<2x8xf32, #tpu.memory_space<vmem>>, vector<2x8xf32>
    %c0_1 = arith.constant 0 : index
    %c0_2 = arith.constant 0 : index
    %1 = vector.load %arg2[%c0_1, %c0_2] : memref<2x16xf32, #tpu.memory_space<vmem>>, vector<2x16xf32>
    %2 = arith.truncf %0 : vector<2x8xf32> to vector<2x8xbf16>
    %c0_3 = arith.constant 0 : index
    %c0_4 = arith.constant 0 : index
    %3 = vector.load %arg3[%c0_3, %c0_4] : memref<8x32xbf16, #tpu.memory_space<vmem>>, vector<8x32xbf16>
    %cst = arith.constant dense<0.000000e+00> : vector<2x32xf32>
    %4 = tpu.matmul %2, %3, %cst {dimension_numbers = #tpu.dot_dimension_numbers<[1], [0], [0], [1], [0, 0, 1, 1], [], []>} : vector<2x8xbf16>, vector<8x32xbf16>, vector<2x32xf32> -> vector<2x32xf32>
    %5 = arith.truncf %1 : vector<2x16xf32> to vector<2x16xbf16>
    %c0_5 = arith.constant 0 : index
    %c0_6 = arith.constant 0 : index
    %6 = vector.load %arg4[%c0_5, %c0_6] : memref<16x32xbf16, #tpu.memory_space<vmem>>, vector<16x32xbf16>
    %cst_7 = arith.constant dense<0.000000e+00> : vector<2x32xf32>
    %7 = tpu.matmul %5, %6, %cst_7 {dimension_numbers = #tpu.dot_dimension_numbers<[1], [0], [0], [1], [0, 0, 1, 1], [], []>} : vector<2x16xbf16>, vector<16x32xbf16>, vector<2x32xf32> -> vector<2x32xf32>
    %8 = arith.addf %4, %7 : vector<2x32xf32>
    %c0_8 = arith.constant 0 : index
    %c0_9 = arith.constant 0 : index
    %9 = vector.load %arg5[%c0_8, %c0_9] : memref<1x32xf32, #tpu.memory_space<vmem>>, vector<1x32xf32>
    %10 = vector.broadcast %9 : vector<1x32xf32> to vector<2x32xf32>
    %11 = arith.addf %8, %10 : vector<2x32xf32>
    %cst_10 = arith.constant 0.000000e+00 : f32
    %12 = vector.broadcast %cst_10 : f32 to vector<2x32xf32>
    %13 = arith.maximumf %11, %12 : vector<2x32xf32>
    %14 = arith.truncf %13 : vector<2x32xf32> to vector<2x32xbf16>
    %c0_11 = arith.constant 0 : index
    %c0_12 = arith.constant 0 : index
    %15 = vector.load %arg6[%c0_11, %c0_12] : memref<32x16xbf16, #tpu.memory_space<vmem>>, vector<32x16xbf16>
    %cst_13 = arith.constant dense<0.000000e+00> : vector<2x16xf32>
    %16 = tpu.matmul %14, %15, %cst_13 {dimension_numbers = #tpu.dot_dimension_numbers<[1], [0], [0], [1], [0, 0, 1, 1], [], []>} : vector<2x32xbf16>, vector<32x16xbf16>, vector<2x16xf32> -> vector<2x16xf32>
    %c0_14 = arith.constant 0 : index
    %c0_15 = arith.constant 0 : index
    %17 = vector.load %arg7[%c0_14, %c0_15] : memref<1x16xf32, #tpu.memory_space<vmem>>, vector<1x16xf32>
    %18 = vector.broadcast %17 : vector<1x16xf32> to vector<2x16xf32>
    %19 = arith.addf %16, %18 : vector<2x16xf32>
    %cst_16 = arith.constant 0.000000e+00 : f32
    %20 = vector.broadcast %cst_16 : f32 to vector<2x16xf32>
    %21 = arith.maximumf %19, %20 : vector<2x16xf32>
    %c0_17 = arith.constant 0 : index
    %c0_18 = arith.constant 0 : index
    %22 = vector.load %arg8[%c0_17, %c0_18] : memref<2x40xf32, #tpu.memory_space<vmem>>, vector<2x8xf32>
    tpu.vector_store %arg8[%c0_17, %c0_18], %0 {strides = array<i32>} : memref<2x40xf32, #tpu.memory_space<vmem>>, vector<2x8xf32>,
    %c0_19 = arith.constant 0 : index
    %c8 = arith.constant 8 : index
    %23 = vector.load %arg8[%c0_19, %c8] : memref<2x40xf32, #tpu.memory_space<vmem>>, vector<2x16xf32>
    tpu.vector_store %arg8[%c0_19, %c8], %1 {strides = array<i32>} : memref<2x40xf32, #tpu.memory_space<vmem>>, vector<2x16xf32>,
    %c0_20 = arith.constant 0 : index
    %c24 = arith.constant 24 : index
    %24 = vector.load %arg8[%c0_20, %c24] : memref<2x40xf32, #tpu.memory_space<vmem>>, vector<2x16xf32>
    tpu.vector_store %arg8[%c0_20, %c24], %21 {strides = array<i32>} : memref<2x40xf32, #tpu.memory_space<vmem>>, vector<2x16xf32>,
    return
  }
  func.func @transform_0(%arg0: i32) -> (i32, i32) {
    %c0_i32 = arith.constant 0 : i32
    %c0_i32_0 = arith.constant 0 : i32
    return %arg0, %c0_i32 : i32, i32
  }
  func.func @transform_1(%arg0: i32) -> (i32, i32) {
    %c0_i32 = arith.constant 0 : i32
    %c0_i32_0 = arith.constant 0 : i32
    return %arg0, %c0_i32 : i32, i32
  }
  func.func @transform_2(%arg0: i32) -> (i32, i32) {
    %c0_i32 = arith.constant 0 : i32
    %c0_i32_0 = arith.constant 0 : i32
    %c0_i32_1 = arith.constant 0 : i32
    return %c0_i32, %c0_i32_0 : i32, i32
  }
  func.func @transform_3(%arg0: i32) -> (i32, i32) {
    %c0_i32 = arith.constant 0 : i32
    %c0_i32_0 = arith.constant 0 : i32
    %c0_i32_1 = arith.constant 0 : i32
    return %c0_i32, %c0_i32_0 : i32, i32
  }
  func.func @transform_4(%arg0: i32) -> (i32, i32) {
    %c0_i32 = arith.constant 0 : i32
    %c0_i32_0 = arith.constant 0 : i32
    %c0_i32_1 = arith.constant 0 : i32
    return %c0_i32, %c0_i32_0 : i32, i32
  }
  func.func @transform_5(%arg0: i32) -> (i32, i32) {
    %c0_i32 = arith.constant 0 : i32
    %c0_i32_0 = arith.constant 0 : i32
    %c0_i32_1 = arith.constant 0 : i32
    return %c0_i32, %c0_i32_0 : i32, i32
  }
  func.func @transform_6(%arg0: i32) -> (i32, i32) {
    %c0_i32 = arith.constant 0 : i32
    %c0_i32_0 = arith.constant 0 : i32
    %c0_i32_1 = arith.constant 0 : i32
    return %c0_i32, %c0_i32_0 : i32, i32
  }
  func.func @transform_7(%arg0: i32) -> (i32, i32) {
    %c0_i32 = arith.constant 0 : i32
    %c0_i32_0 = arith.constant 0 : i32
    return %arg0, %c0_i32 : i32, i32
  }
}

module attributes {stable_mosaic.version = 11 : i64} {
  func.func @_fusion_kernel_y(%arg0: i32, %arg1: memref<2x8xf32, #tpu.memory_space<vmem>>, %arg2: memref<2x16xf32, #tpu.memory_space<vmem>>, %arg3: memref<8x32xbf16, #tpu.memory_space<vmem>>, %arg4: memref<16x32xbf16, #tpu.memory_space<vmem>>, %arg5: memref<1x32xf32, #tpu.memory_space<vmem>>, %arg6: memref<32x16xbf16, #tpu.memory_space<vmem>>, %arg7: memref<1x16xf32, #tpu.memory_space<vmem>>, %arg8: memref<2x16xf32, #tpu.memory_space<vmem>>) attributes {dimension_semantics = [#tpu.dimension_semantics<parallel>], iteration_bounds = array<i64: 1>, scalar_prefetch = 0 : i64, scratch_operands = 0 : i64, tpu.core_type = #tpu.core_type<tc>, window_params = [{transform_indices = @transform_0, window_bounds = array<i64: 2, 8>}, {transform_indices = @transform_1, window_bounds = array<i64: 2, 16>}, {pipeline_mode = #tpu.pipeline_mode<synchronous>, transform_indices = @transform_2, window_bounds = array<i64: 8, 32>}, {pipeline_mode = #tpu.pipeline_mode<synchronous>, transform_indices = @transform_3, window_bounds = array<i64: 16, 32>}, {pipeline_mode = #tpu.pipeline_mode<synchronous>, transform_indices = @transform_4, window_bounds = array<i64: 1, 32>}, {pipeline_mode = #tpu.pipeline_mode<synchronous>, transform_indices = @transform_5, window_bounds = array<i64: 32, 16>}, {pipeline_mode = #tpu.pipeline_mode<synchronous>, transform_indices = @transform_6, window_bounds = array<i64: 1, 16>}, {transform_indices = @transform_7, window_bounds = array<i64: 2, 16>}]} {
    %c0 = arith.constant 0 : index
    %c0_0 = arith.constant 0 : index
    %0 = vector.load %arg1[%c0, %c0_0] : memref<2x8xf32, #tpu.memory_space<vmem>>, vector<2x8xf32>
    %c0_1 = arith.constant 0 : index
    %c0_2 = arith.constant 0 : index
    %1 = vector.load %arg2[%c0_1, %c0_2] : memref<2x16xf32, #tpu.memory_space<vmem>>, vector<2x16xf32>
    %2 = arith.truncf %0 : vector<2x8xf32> to vector<2x8xbf16>
    %c0_3 = arith.constant 0 : index
    %c0_4 = arith.constant 0 : index
    %3 = vector.load %arg3[%c0_3, %c0_4] : memref<8x32xbf16, #tpu.memory_space<vmem>>, vector<8x32xbf16>
    %cst = arith.constant dense<0.000000e+00> : vector<2x32xf32>
    %4 = tpu.matmul %2, %3, %cst {dimension_numbers = #tpu.dot_dimension_numbers<[1], [0], [0], [1], [0, 0, 1, 1], [], []>} : vector<2x8xbf16>, vector<8x32xbf16>, vector<2x32xf32> -> vector<2x32xf32>
    %5 = arith.truncf %1 : vector<2x16xf32> to vector<2x16xbf16>
    %c0_5 = arith.constant 0 : index
    %c0_6 = arith.constant 0 : index
    %6 = vector.load %arg4[%c0_5, %c0_6] : memref<16x32xbf16, #tpu.memory_space<vmem>>, vector<16x32xbf16>
    %cst_7 = arith.constant dense<0.000000e+00> : vector<2x32xf32>
    %7 = tpu.matmul %5, %6, %cst_7 {dimension_numbers = #tpu.dot_dimension_numbers<[1], [0], [0], [1], [0, 0, 1, 1], [], []>} : vector<2x16xbf16>, vector<16x32xbf16>, vector<2x32xf32> -> vector<2x32xf32>
    %8 = arith.addf %4, %7 : vector<2x32xf32>
    %c0_8 = arith.constant 0 : index
    %c0_9 = arith.constant 0 : index
    %9 = vector.load %arg5[%c0_8, %c0_9] : memref<1x32xf32, #tpu.memory_space<vmem>>, vector<1x32xf32>
    %10 = vector.broadcast %9 : vector<1x32xf32> to vector<2x32xf32>
    %11 = arith.addf %8, %10 : vector<2x32xf32>
    %cst_10 = arith.constant 0.000000e+00 : f32
    %12 = vector.broadcast %cst_10 : f32 to vector<2x32xf32>
    %13 = arith.maximumf %11, %12 : vector<2x32xf32>
    %14 = arith.truncf %13 : vector<2x32xf32> to vector<2x32xbf16>
    %c0_11 = arith.constant 0 : index
    %c0_12 = arith.constant 0 : index
    %15 = vector.load %arg6[%c0_11, %c0_12] : memref<32x16xbf16, #tpu.memory_space<vmem>>, vector<32x16xbf16>
    %cst_13 = arith.constant dense<0.000000e+00> : vector<2x16xf32>
    %16 = tpu.matmul %14, %15, %cst_13 {dimension_numbers = #tpu.dot_dimension_numbers<[1], [0], [0], [1], [0, 0, 1, 1], [], []>} : vector<2x32xbf16>, vector<32x16xbf16>, vector<2x16xf32> -> vector<2x16xf32>
    %c0_14 = arith.constant 0 : index
    %c0_15 = arith.constant 0 : index
    %17 = vector.load %arg7[%c0_14, %c0_15] : memref<1x16xf32, #tpu.memory_space<vmem>>, vector<1x16xf32>
    %18 = vector.broadcast %17 : vector<1x16xf32> to vector<2x16xf32>
    %19 = arith.addf %16, %18 : vector<2x16xf32>
    %cst_16 = arith.constant 0.000000e+00 : f32
    %20 = vector.broadcast %cst_16 : f32 to vector<2x16xf32>
    %21 = arith.maximumf %19, %20 : vector<2x16xf32>
    %c0_17 = arith.constant 0 : index
    %c0_18 = arith.constant 0 : index
    %22 = vector.load %arg8[%c0_17, %c0_18] : memref<2x16xf32, #tpu.memory_space<vmem>>, vector<2x16xf32>
    tpu.vector_store %arg8[%c0_17, %c0_18], %21 {strides = array<i32>} : memref<2x16xf32, #tpu.memory_space<vmem>>, vector<2x16xf32>,
    return
  }
  func.func @transform_0(%arg0: i32) -> (i32, i32) {
    %c0_i32 = arith.constant 0 : i32
    %c0_i32_0 = arith.constant 0 : i32
    return %arg0, %c0_i32 : i32, i32
  }
  func.func @transform_1(%arg0: i32) -> (i32, i32) {
    %c0_i32 = arith.constant 0 : i32
    %c0_i32_0 = arith.constant 0 : i32
    return %arg0, %c0_i32 : i32, i32
  }
  func.func @transform_2(%arg0: i32) -> (i32, i32) {
    %c0_i32 = arith.constant 0 : i32
    %c0_i32_0 = arith.constant 0 : i32
    %c0_i32_1 = arith.constant 0 : i32
    return %c0_i32, %c0_i32_0 : i32, i32
  }
  func.func @transform_3(%arg0: i32) -> (i32, i32) {
    %c0_i32 = arith.constant 0 : i32
    %c0_i32_0 = arith.constant 0 : i32
    %c0_i32_1 = arith.constant 0 : i32
    return %c0_i32, %c0_i32_0 : i32, i32
  }
  func.func @transform_4(%arg0: i32) -> (i32, i32) {
    %c0_i32 = arith.constant 0 : i32
    %c0_i32_0 = arith.constant 0 : i32
    %c0_i32_1 = arith.constant 0 : i32
    return %c0_i32, %c0_i32_0 : i32, i32
  }
  func.func @transform_5(%arg0: i32) -> (i32, i32) {
    %c0_i32 = arith.constant 0 : i32
    %c0_i32_0 = arith.constant 0 : i32
    %c0_i32_1 = arith.constant 0 : i32
    return %c0_i32, %c0_i32_0 : i32, i32
  }
  func.func @transform_6(%arg0: i32) -> (i32, i32) {
    %c0_i32 = arith.constant 0 : i32
    %c0_i32_0 = arith.constant 0 : i32
    %c0_i32_1 = arith.constant 0 : i32
    return %c0_i32, %c0_i32_0 : i32, i32
  }
  func.func @transform_7(%arg0: i32) -> (i32, i32) {
    %c0_i32 = arith.constant 0 : i32
    %c0_i32_0 = arith.constant 0 : i32
    return %arg0, %c0_i32 : i32, i32
  }
}

</mosaic_0001>

<llo_original>
// kernel: tpu_custom_call.1
$region0: #{tpu_custom_call.1}
  #allocation0 [shape = 'u32[]', space=smem, size = 0x4, offset = 0x4, fixed_abs, tag = 'smem constant byte address 0x4 - core index']
  #allocation1 [shape = 'u32[72,128]{1,0:T(1,128)}', space=vmem, size = 0x9000, scoped, tag = 'internal scratch']
  %s0 = inlined_call_operand.vmem [shape: f32[2,8], index: 0, kind: input, shape index: {}]
  %s1 = inlined_call_operand.vmem [shape: f32[2,16], index: 1, kind: input, shape index: {}]
  %s2 = inlined_call_operand.vmem [shape: bf16[8,32], index: 2, kind: input, shape index: {}]
  %s3 = inlined_call_operand.vmem [shape: bf16[16,32], index: 3, kind: input, shape index: {}]
  %s4 = inlined_call_operand.vmem [shape: f32[1,32], index: 4, kind: input, shape index: {}]
  %s5 = inlined_call_operand.vmem [shape: bf16[32,16], index: 5, kind: input, shape index: {}]
  %s6 = inlined_call_operand.vmem [shape: f32[1,16], index: 6, kind: input, shape index: {}]
  %s7 = inlined_call_operand.hbm [shape: f32[2,40], index: 7, kind: output, shape index: {}]
  %s8 = sld [smem:[#allocation0]]
  $region38: #{tpu_custom_call.1} parent=0
    _
  %s10 = ssub.s32 1, %s8
  %s11 = scalar_select 0, %s10, %s8
  $region1: #{tpu_custom_call.1} parent=0
    #allocation2 [shape = 'u8[1024]{0}', space=vmem, size = 0x400, scoped, tag = 'output window, operand 0, single buffered']
    #allocation3 [shape = 's32[1]{0}', space=sflag, size = 0x4, scoped, tag = 'scoped memory for tpu_custom_call.1']
    %12 = vsyncpa [#allocation3], 0
    // Predicated region
    $region2: #{tpu_custom_call.1} parent=1 // pred_check
      _
    $region3: #{tpu_custom_call.1} parent=1 // pred_check_branch
      %14 = sbr.rel (0) target = $region5
    $region4: #{tpu_custom_call.1} parent=1 // pred_region
      _
    $region5: #{tpu_custom_call.1} parent=1 // pred_fallthru
      _
    // Predicated region
    $region6: #{tpu_custom_call.1} parent=1 // pred_check
      _
    $region7: #{tpu_custom_call.1} parent=1 // pred_check_branch
      %16 = sbr.rel (0) target = $region9
    $region8: #{tpu_custom_call.1} parent=1 // pred_region
      _
    $region9: #{tpu_custom_call.1} parent=1 // pred_fallthru
      _
    // Predicated region
    $region10: #{tpu_custom_call.1} parent=1 // pred_check
      _
    $region11: #{tpu_custom_call.1} parent=1 // pred_check_branch
      %18 = sbr.rel (0) target = $region13
    $region12: #{tpu_custom_call.1} parent=1 // pred_region
      _
    $region13: #{tpu_custom_call.1} parent=1 // pred_fallthru
      _
    // Predicated region
    $region14: #{tpu_custom_call.1} parent=1 // pred_check
      _
    $region15: #{tpu_custom_call.1} parent=1 // pred_check_branch
      %20 = sbr.rel (0) target = $region17
    $region16: #{tpu_custom_call.1} parent=1 // pred_region
      _
    $region17: #{tpu_custom_call.1} parent=1 // pred_fallthru
      _
    // Predicated region
    $region18: #{tpu_custom_call.1} parent=1 // pred_check
      _
    $region19: #{tpu_custom_call.1} parent=1 // pred_check_branch
      %22 = sbr.rel (0) target = $region21
    $region20: #{tpu_custom_call.1} parent=1 // pred_region
      _
    $region21: #{tpu_custom_call.1} parent=1 // pred_fallthru
      _
    // Predicated region
    $region22: #{tpu_custom_call.1} parent=1 // pred_check
      _
    $region23: #{tpu_custom_call.1} parent=1 // pred_check_branch
      %24 = sbr.rel (0) target = $region25
    $region24: #{tpu_custom_call.1} parent=1 // pred_region
      _
    $region25: #{tpu_custom_call.1} parent=1 // pred_fallthru
      _
    // Predicated region
    $region26: #{tpu_custom_call.1} parent=1 // pred_check
      _
    $region27: #{tpu_custom_call.1} parent=1 // pred_check_branch
      %26 = sbr.rel (0) target = $region29
    $region28: #{tpu_custom_call.1} parent=1 // pred_region
      _
    $region29: #{tpu_custom_call.1} parent=1 // pred_fallthru
      _
    %v28 = vld [vmem:[%s0] sm:$0x3]
    %v29 = vld [vmem:[%s1] sm:$0x3]
    %v30 = vpack.c.bf16 %v28, %v28
    %v31 = vld [vmem:[%s2] sm:$0xf]
    %v32 = vpack.c.bf16 %v29, %v29
    %v33 = vld [vmem:[%s3] sm:$0xf]
    %v34 = vld [vmem:[%s3 + $0x4] sm:$0xf]
    %v37 = vunpack.c.l.b16 %v33
    %v38 = vunpack.c.l.b16 %v34
    %v39 = vpack.c.b16 %v38, %v37
    %vm41 = vcmask 130048
    %v43 = vsel %vm41, %v32, 0
    %45 = vmatpush.bf16.msra.mxu0 0
    %46 = vmatpush.bf16.msra.mxu0 0
    %47 = vmatpush.bf16.msra.mxu0 0
    %48 = vmatpush.bf16.msra.mxu0 0
    %49 = vmatpush.bf16.msra.mxu0 0
    %50 = vmatpush.bf16.msra.mxu0 0
    %51 = vmatpush.bf16.msra.mxu0 0
    %52 = vmatpush.bf16.msra.mxu0 %v39
    %53 = vmatmul.bf16.gmra.mxu0 %v43
    %v54 = vpop.f32.mrf.mxu0
    %v55 = vadd.f32 0.0, %v54
    %v56 = vpop.f32.mrf.mxu0
    %57 = vdwg.mxu0
    %vm58 = vcmask 64512
    %v60 = vsel %vm58, %v30, 0
    %vm62 = vcmask 1043456
    %v64 = vsel %vm62, %v31, 0
    %66 = vmatpush.bf16.msra.mxu0 0
    %67 = vmatpush.bf16.msra.mxu0 0
    %68 = vmatpush.bf16.msra.mxu0 0
    %69 = vmatpush.bf16.msra.mxu0 0
    %70 = vmatpush.bf16.msra.mxu0 0
    %71 = vmatpush.bf16.msra.mxu0 0
    %72 = vmatpush.bf16.msra.mxu0 0
    %73 = vmatpush.bf16.msra.mxu0 %v64
    %74 = vmatmul.bf16.gmra.mxu0 %v60
    %v75 = vpop.f32.mrf.mxu0
    %v76 = vadd.f32 %v55, %v75
    %v77 = vpop.f32.mrf.mxu0
    %78 = vdwg.mxu0
    %v79 = vld [vmem:[%s4] sm:$0x1]
    %v81 = vperm.slane %v79, 0
    %v83 = vadd.f32 %v76, %v81
    %v84 = vmax.f32 %v83, 0.0
    %v85 = vpack.c.bf16 %v84, %v84
    %v86 = vld [vmem:[%s5] sm:$0xf]
    %v87 = vld [vmem:[%s5 + $0x4] sm:$0xf]
    %v88 = vld [vmem:[%s5 + $0x8] sm:$0xf]
    %v89 = vld [vmem:[%s5 + $0xc] sm:$0xf]
    %v90 = vld [vmem:[%s6] sm:$0x1]
    %v92 = vperm.slane %v90, 0
    %v98 = vunpack.c.l.b16 %v86
    %v99 = vunpack.c.l.b16 %v87
    %v100 = vunpack.c.l.b16 %v88
    %v101 = vunpack.c.l.b16 %v89
    %v102 = vpack.c.b16 %v99, %v98
    %v103 = vpack.c.b16 %v101, %v100
    %vm106 = vcmask 261120
    %v108 = vsel %vm106, %v85, 0
    %110 = vmatpush.bf16.msra.mxu0 0
    %111 = vmatpush.bf16.msra.mxu0 0
    %112 = vmatpush.bf16.msra.mxu0 0
    %113 = vmatpush.bf16.msra.mxu0 0
    %114 = vmatpush.bf16.msra.mxu0 0
    %115 = vmatpush.bf16.msra.mxu0 0
    %116 = vmatpush.bf16.msra.mxu0 %v103
    %117 = vmatpush.bf16.msra.mxu0 %v102
    %118 = vmatmul.bf16.gmra.mxu0 %v108
    %v119 = vpop.f32.mrf.mxu0
    %v120 = vadd.f32 %v92, %v119
    %v121 = vpop.f32.mrf.mxu0
    %122 = vdwg.mxu0
    %v123 = vmax.f32 %v120, 0.0
    %vm124 = vcmask 58368
    %125 = vst.msk [vmem:[#allocation2] sm:$0x3] %vm124, %v28
    %127 = vrot.lane.b32.xlu0 %v29, 8
    %v128 = vpop.permute.xlu0 %127
    %vm130 = vcmask 189504
    %131 = vst.msk [vmem:[#allocation2] sm:$0x3] %vm130, %v128
    %133 = vrot.lane.b32.xlu0 %v123, 24
    %v134 = vpop.permute.xlu0 %133
    %vm136 = vcmask 320704
    %137 = vst.msk [vmem:[#allocation2] sm:$0x3] %vm136, %v134
    // Predicated region
    $region30: #{tpu_custom_call.1} parent=1 // pred_check
      _
    $region31: #{tpu_custom_call.1} parent=1 // pred_check_branch
      %139 = sbr.rel (0) target = $region33
    $region32: #{tpu_custom_call.1} parent=1 // pred_region
      %141 = vsyncadd [#allocation3], 0
      %s143 = sshll.u32 [#allocation2], 4
      %s144 = int_to_ptr.vmem [resolvable:$true] %s143
      %s145 = sshll.u32 %s7, 4
      %s146 = int_to_ptr.hbm [resolvable:$true] %s145
      %148 = dma.vmem_to_hbm [thread:$0]  %s144, 32, %s146, [#allocation3]
    $region33: #{tpu_custom_call.1} parent=1 // pred_fallthru
      _
    // Predicated region
    $region34: #{tpu_custom_call.1} parent=1 // pred_check
      _
    $region35: #{tpu_custom_call.1} parent=1 // pred_check_branch
      %150 = sbr.rel (0) target = $region37
    $region36: #{tpu_custom_call.1} parent=1 // pred_region
      %152 = dma.done [#allocation3], 32
    $region37: #{tpu_custom_call.1} parent=1 // pred_fallthru
      _
    %153 = vsyncpa [#allocation3], 1

// kernel: tpu_custom_call.1
$region0: #{tpu_custom_call.1}
  #allocation0 [shape = 'u32[]', space=smem, size = 0x4, offset = 0x4, fixed_abs, tag = 'smem constant byte address 0x4 - core index']
  #allocation1 [shape = 'u32[72,128]{1,0:T(1,128)}', space=vmem, size = 0x9000, scoped, tag = 'internal scratch']
  %s0 = inlined_call_operand.vmem [shape: f32[2,8], index: 0, kind: input, shape index: {}]
  %s1 = inlined_call_operand.vmem [shape: f32[2,16], index: 1, kind: input, shape index: {}]
  %s2 = inlined_call_operand.vmem [shape: bf16[8,32], index: 2, kind: input, shape index: {}]
  %s3 = inlined_call_operand.vmem [shape: bf16[16,32], index: 3, kind: input, shape index: {}]
  %s4 = inlined_call_operand.vmem [shape: f32[1,32], index: 4, kind: input, shape index: {}]
  %s5 = inlined_call_operand.vmem [shape: bf16[32,16], index: 5, kind: input, shape index: {}]
  %s6 = inlined_call_operand.vmem [shape: f32[1,16], index: 6, kind: input, shape index: {}]
  %s7 = inlined_call_operand.hbm [shape: f32[2,40], index: 7, kind: output, shape index: {}]
  %s8 = sld [smem:[#allocation0]]
  $region38: #{tpu_custom_call.1} parent=0
    _
  %s10 = ssub.s32 1, %s8
  %s11 = scalar_select 0, %s10, %s8
  $region1: #{tpu_custom_call.1} parent=0
    #allocation2 [shape = 'u8[1024]{0}', space=vmem, size = 0x400, scoped, tag = 'output window, operand 0, single buffered']
    #allocation3 [shape = 's32[1]{0}', space=sflag, size = 0x4, scoped, tag = 'scoped memory for tpu_custom_call.1']
    %12 = vsyncpa [#allocation3], 0
    // Predicated region
    $region2: #{tpu_custom_call.1} parent=1 // pred_check
      _
    $region3: #{tpu_custom_call.1} parent=1 // pred_check_branch
      %14 = sbr.rel (0) target = $region5
    $region4: #{tpu_custom_call.1} parent=1 // pred_region
      _
    $region5: #{tpu_custom_call.1} parent=1 // pred_fallthru
      _
    // Predicated region
    $region6: #{tpu_custom_call.1} parent=1 // pred_check
      _
    $region7: #{tpu_custom_call.1} parent=1 // pred_check_branch
      %16 = sbr.rel (0) target = $region9
    $region8: #{tpu_custom_call.1} parent=1 // pred_region
      _
    $region9: #{tpu_custom_call.1} parent=1 // pred_fallthru
      _
    // Predicated region
    $region10: #{tpu_custom_call.1} parent=1 // pred_check
      _
    $region11: #{tpu_custom_call.1} parent=1 // pred_check_branch
      %18 = sbr.rel (0) target = $region13
    $region12: #{tpu_custom_call.1} parent=1 // pred_region
      _
    $region13: #{tpu_custom_call.1} parent=1 // pred_fallthru
      _
    // Predicated region
    $region14: #{tpu_custom_call.1} parent=1 // pred_check
      _
    $region15: #{tpu_custom_call.1} parent=1 // pred_check_branch
      %20 = sbr.rel (0) target = $region17
    $region16: #{tpu_custom_call.1} parent=1 // pred_region
      _
    $region17: #{tpu_custom_call.1} parent=1 // pred_fallthru
      _
    // Predicated region
    $region18: #{tpu_custom_call.1} parent=1 // pred_check
      _
    $region19: #{tpu_custom_call.1} parent=1 // pred_check_branch
      %22 = sbr.rel (0) target = $region21
    $region20: #{tpu_custom_call.1} parent=1 // pred_region
      _
    $region21: #{tpu_custom_call.1} parent=1 // pred_fallthru
      _
    // Predicated region
    $region22: #{tpu_custom_call.1} parent=1 // pred_check
      _
    $region23: #{tpu_custom_call.1} parent=1 // pred_check_branch
      %24 = sbr.rel (0) target = $region25
    $region24: #{tpu_custom_call.1} parent=1 // pred_region
      _
    $region25: #{tpu_custom_call.1} parent=1 // pred_fallthru
      _
    // Predicated region
    $region26: #{tpu_custom_call.1} parent=1 // pred_check
      _
    $region27: #{tpu_custom_call.1} parent=1 // pred_check_branch
      %26 = sbr.rel (0) target = $region29
    $region28: #{tpu_custom_call.1} parent=1 // pred_region
      _
    $region29: #{tpu_custom_call.1} parent=1 // pred_fallthru
      _
    %v28 = vld [vmem:[%s0] sm:$0x3]
    %v29 = vld [vmem:[%s1] sm:$0x3]
    %v30 = vpack.c.bf16 %v28, %v28
    %v31 = vld [vmem:[%s2] sm:$0xf]
    %v32 = vpack.c.bf16 %v29, %v29
    %v33 = vld [vmem:[%s3] sm:$0xf]
    %v34 = vld [vmem:[%s3 + $0x4] sm:$0xf]
    %v37 = vunpack.c.l.b16 %v33
    %v38 = vunpack.c.l.b16 %v34
    %v39 = vpack.c.b16 %v38, %v37
    %vm41 = vcmask 130048
    %v43 = vsel %vm41, %v32, 0
    %45 = vmatpush.bf16.msra.mxu0 0
    %46 = vmatpush.bf16.msra.mxu0 0
    %47 = vmatpush.bf16.msra.mxu0 0
    %48 = vmatpush.bf16.msra.mxu0 0
    %49 = vmatpush.bf16.msra.mxu0 0
    %50 = vmatpush.bf16.msra.mxu0 0
    %51 = vmatpush.bf16.msra.mxu0 0
    %52 = vmatpush.bf16.msra.mxu0 %v39
    %53 = vmatmul.bf16.gmra.mxu0 %v43
    %v54 = vpop.f32.mrf.mxu0
    %v55 = vadd.f32 0.0, %v54
    %v56 = vpop.f32.mrf.mxu0
    %57 = vdwg.mxu0
    %vm58 = vcmask 64512
    %v60 = vsel %vm58, %v30, 0
    %vm62 = vcmask 1043456
    %v64 = vsel %vm62, %v31, 0
    %66 = vmatpush.bf16.msra.mxu0 0
    %67 = vmatpush.bf16.msra.mxu0 0
    %68 = vmatpush.bf16.msra.mxu0 0
    %69 = vmatpush.bf16.msra.mxu0 0
    %70 = vmatpush.bf16.msra.mxu0 0
    %71 = vmatpush.bf16.msra.mxu0 0
    %72 = vmatpush.bf16.msra.mxu0 0
    %73 = vmatpush.bf16.msra.mxu0 %v64
    %74 = vmatmul.bf16.gmra.mxu0 %v60
    %v75 = vpop.f32.mrf.mxu0
    %v76 = vadd.f32 %v55, %v75
    %v77 = vpop.f32.mrf.mxu0
    %78 = vdwg.mxu0
    %v79 = vld [vmem:[%s4] sm:$0x1]
    %v81 = vperm.slane %v79, 0
    %v83 = vadd.f32 %v76, %v81
    %v84 = vmax.f32 %v83, 0.0
    %v85 = vpack.c.bf16 %v84, %v84
    %v86 = vld [vmem:[%s5] sm:$0xf]
    %v87 = vld [vmem:[%s5 + $0x4] sm:$0xf]
    %v88 = vld [vmem:[%s5 + $0x8] sm:$0xf]
    %v89 = vld [vmem:[%s5 + $0xc] sm:$0xf]
    %v90 = vld [vmem:[%s6] sm:$0x1]
    %v92 = vperm.slane %v90, 0
    %v98 = vunpack.c.l.b16 %v86
    %v99 = vunpack.c.l.b16 %v87
    %v100 = vunpack.c.l.b16 %v88
    %v101 = vunpack.c.l.b16 %v89
    %v102 = vpack.c.b16 %v99, %v98
    %v103 = vpack.c.b16 %v101, %v100
    %vm106 = vcmask 261120
    %v108 = vsel %vm106, %v85, 0
    %110 = vmatpush.bf16.msra.mxu0 0
    %111 = vmatpush.bf16.msra.mxu0 0
    %112 = vmatpush.bf16.msra.mxu0 0
    %113 = vmatpush.bf16.msra.mxu0 0
    %114 = vmatpush.bf16.msra.mxu0 0
    %115 = vmatpush.bf16.msra.mxu0 0
    %116 = vmatpush.bf16.msra.mxu0 %v103
    %117 = vmatpush.bf16.msra.mxu0 %v102
    %118 = vmatmul.bf16.gmra.mxu0 %v108
    %v119 = vpop.f32.mrf.mxu0
    %v120 = vadd.f32 %v92, %v119
    %v121 = vpop.f32.mrf.mxu0
    %122 = vdwg.mxu0
    %v123 = vmax.f32 %v120, 0.0
    %vm124 = vcmask 58368
    %125 = vst.msk [vmem:[#allocation2] sm:$0x3] %vm124, %v28
    %127 = vrot.lane.b32.xlu0 %v29, 8
    %v128 = vpop.permute.xlu0 %127
    %vm130 = vcmask 189504
    %131 = vst.msk [vmem:[#allocation2] sm:$0x3] %vm130, %v128
    %133 = vrot.lane.b32.xlu0 %v123, 24
    %v134 = vpop.permute.xlu0 %133
    %vm136 = vcmask 320704
    %137 = vst.msk [vmem:[#allocation2] sm:$0x3] %vm136, %v134
    // Predicated region
    $region30: #{tpu_custom_call.1} parent=1 // pred_check
      _
    $region31: #{tpu_custom_call.1} parent=1 // pred_check_branch
      %139 = sbr.rel (0) target = $region33
    $region32: #{tpu_custom_call.1} parent=1 // pred_region
      %141 = vsyncadd [#allocation3], 0
      %s143 = sshll.u32 [#allocation2], 4
      %s144 = int_to_ptr.vmem [resolvable:$true] %s143
      %s145 = sshll.u32 %s7, 4
      %s146 = int_to_ptr.hbm [resolvable:$true] %s145
      %148 = dma.vmem_to_hbm [thread:$0]  %s144, 32, %s146, [#allocation3]
    $region33: #{tpu_custom_call.1} parent=1 // pred_fallthru
      _
    // Predicated region
    $region34: #{tpu_custom_call.1} parent=1 // pred_check
      _
    $region35: #{tpu_custom_call.1} parent=1 // pred_check_branch
      %150 = sbr.rel (0) target = $region37
    $region36: #{tpu_custom_call.1} parent=1 // pred_region
      %152 = dma.done [#allocation3], 32
    $region37: #{tpu_custom_call.1} parent=1 // pred_fallthru
      _
    %153 = vsyncpa [#allocation3], 1

// kernel: tpu_custom_call.1
$region0: #{tpu_custom_call.1}
  #allocation0 [shape = 'u32[]', space=smem, size = 0x4, offset = 0x4, fixed_abs, tag = 'smem constant byte address 0x4 - core index']
  #allocation1 [shape = 'u32[72,128]{1,0:T(1,128)}', space=vmem, size = 0x9000, scoped, tag = 'internal scratch']
  %s0 = inlined_call_operand.vmem [shape: f32[2,8], index: 0, kind: input, shape index: {}]
  %s1 = inlined_call_operand.vmem [shape: f32[2,16], index: 1, kind: input, shape index: {}]
  %s2 = inlined_call_operand.vmem [shape: bf16[8,32], index: 2, kind: input, shape index: {}]
  %s3 = inlined_call_operand.vmem [shape: bf16[16,32], index: 3, kind: input, shape index: {}]
  %s4 = inlined_call_operand.vmem [shape: f32[1,32], index: 4, kind: input, shape index: {}]
  %s5 = inlined_call_operand.vmem [shape: bf16[32,16], index: 5, kind: input, shape index: {}]
  %s6 = inlined_call_operand.vmem [shape: f32[1,16], index: 6, kind: input, shape index: {}]
  %s7 = inlined_call_operand.hbm [shape: f32[2,16], index: 7, kind: output, shape index: {}]
  %s8 = sld [smem:[#allocation0]]
  $region38: #{tpu_custom_call.1} parent=0
    _
  %s10 = ssub.s32 1, %s8
  %s11 = scalar_select 0, %s10, %s8
  $region1: #{tpu_custom_call.1} parent=0
    #allocation2 [shape = 'u8[1024]{0}', space=vmem, size = 0x400, scoped, tag = 'output window, operand 0, single buffered']
    #allocation3 [shape = 's32[1]{0}', space=sflag, size = 0x4, scoped, tag = 'scoped memory for tpu_custom_call.1']
    %12 = vsyncpa [#allocation3], 0
    // Predicated region
    $region2: #{tpu_custom_call.1} parent=1 // pred_check
      _
    $region3: #{tpu_custom_call.1} parent=1 // pred_check_branch
      %14 = sbr.rel (0) target = $region5
    $region4: #{tpu_custom_call.1} parent=1 // pred_region
      _
    $region5: #{tpu_custom_call.1} parent=1 // pred_fallthru
      _
    // Predicated region
    $region6: #{tpu_custom_call.1} parent=1 // pred_check
      _
    $region7: #{tpu_custom_call.1} parent=1 // pred_check_branch
      %16 = sbr.rel (0) target = $region9
    $region8: #{tpu_custom_call.1} parent=1 // pred_region
      _
    $region9: #{tpu_custom_call.1} parent=1 // pred_fallthru
      _
    // Predicated region
    $region10: #{tpu_custom_call.1} parent=1 // pred_check
      _
    $region11: #{tpu_custom_call.1} parent=1 // pred_check_branch
      %18 = sbr.rel (0) target = $region13
    $region12: #{tpu_custom_call.1} parent=1 // pred_region
      _
    $region13: #{tpu_custom_call.1} parent=1 // pred_fallthru
      _
    // Predicated region
    $region14: #{tpu_custom_call.1} parent=1 // pred_check
      _
    $region15: #{tpu_custom_call.1} parent=1 // pred_check_branch
      %20 = sbr.rel (0) target = $region17
    $region16: #{tpu_custom_call.1} parent=1 // pred_region
      _
    $region17: #{tpu_custom_call.1} parent=1 // pred_fallthru
      _
    // Predicated region
    $region18: #{tpu_custom_call.1} parent=1 // pred_check
      _
    $region19: #{tpu_custom_call.1} parent=1 // pred_check_branch
      %22 = sbr.rel (0) target = $region21
    $region20: #{tpu_custom_call.1} parent=1 // pred_region
      _
    $region21: #{tpu_custom_call.1} parent=1 // pred_fallthru
      _
    // Predicated region
    $region22: #{tpu_custom_call.1} parent=1 // pred_check
      _
    $region23: #{tpu_custom_call.1} parent=1 // pred_check_branch
      %24 = sbr.rel (0) target = $region25
    $region24: #{tpu_custom_call.1} parent=1 // pred_region
      _
    $region25: #{tpu_custom_call.1} parent=1 // pred_fallthru
      _
    // Predicated region
    $region26: #{tpu_custom_call.1} parent=1 // pred_check
      _
    $region27: #{tpu_custom_call.1} parent=1 // pred_check_branch
      %26 = sbr.rel (0) target = $region29
    $region28: #{tpu_custom_call.1} parent=1 // pred_region
      _
    $region29: #{tpu_custom_call.1} parent=1 // pred_fallthru
      _
    %v28 = vld [vmem:[%s0] sm:$0x3]
    %v29 = vld [vmem:[%s1] sm:$0x3]
    %v30 = vpack.c.bf16 %v28, %v28
    %v31 = vld [vmem:[%s2] sm:$0xf]
    %v32 = vpack.c.bf16 %v29, %v29
    %v33 = vld [vmem:[%s3] sm:$0xf]
    %v34 = vld [vmem:[%s3 + $0x4] sm:$0xf]
    %v37 = vunpack.c.l.b16 %v33
    %v38 = vunpack.c.l.b16 %v34
    %v39 = vpack.c.b16 %v38, %v37
    %vm41 = vcmask 130048
    %v43 = vsel %vm41, %v32, 0
    %45 = vmatpush.bf16.msra.mxu0 0
    %46 = vmatpush.bf16.msra.mxu0 0
    %47 = vmatpush.bf16.msra.mxu0 0
    %48 = vmatpush.bf16.msra.mxu0 0
    %49 = vmatpush.bf16.msra.mxu0 0
    %50 = vmatpush.bf16.msra.mxu0 0
    %51 = vmatpush.bf16.msra.mxu0 0
    %52 = vmatpush.bf16.msra.mxu0 %v39
    %53 = vmatmul.bf16.gmra.mxu0 %v43
    %v54 = vpop.f32.mrf.mxu0
    %v55 = vadd.f32 0.0, %v54
    %v56 = vpop.f32.mrf.mxu0
    %57 = vdwg.mxu0
    %vm58 = vcmask 64512
    %v60 = vsel %vm58, %v30, 0
    %vm62 = vcmask 1043456
    %v64 = vsel %vm62, %v31, 0
    %66 = vmatpush.bf16.msra.mxu0 0
    %67 = vmatpush.bf16.msra.mxu0 0
    %68 = vmatpush.bf16.msra.mxu0 0
    %69 = vmatpush.bf16.msra.mxu0 0
    %70 = vmatpush.bf16.msra.mxu0 0
    %71 = vmatpush.bf16.msra.mxu0 0
    %72 = vmatpush.bf16.msra.mxu0 0
    %73 = vmatpush.bf16.msra.mxu0 %v64
    %74 = vmatmul.bf16.gmra.mxu0 %v60
    %v75 = vpop.f32.mrf.mxu0
    %v76 = vadd.f32 %v55, %v75
    %v77 = vpop.f32.mrf.mxu0
    %78 = vdwg.mxu0
    %v79 = vld [vmem:[%s4] sm:$0x1]
    %v81 = vperm.slane %v79, 0
    %v83 = vadd.f32 %v76, %v81
    %v84 = vmax.f32 %v83, 0.0
    %v85 = vpack.c.bf16 %v84, %v84
    %v86 = vld [vmem:[%s5] sm:$0xf]
    %v87 = vld [vmem:[%s5 + $0x4] sm:$0xf]
    %v88 = vld [vmem:[%s5 + $0x8] sm:$0xf]
    %v89 = vld [vmem:[%s5 + $0xc] sm:$0xf]
    %v90 = vld [vmem:[%s6] sm:$0x1]
    %v92 = vperm.slane %v90, 0
    %v98 = vunpack.c.l.b16 %v86
    %v99 = vunpack.c.l.b16 %v87
    %v100 = vunpack.c.l.b16 %v88
    %v101 = vunpack.c.l.b16 %v89
    %v102 = vpack.c.b16 %v99, %v98
    %v103 = vpack.c.b16 %v101, %v100
    %vm106 = vcmask 261120
    %v108 = vsel %vm106, %v85, 0
    %110 = vmatpush.bf16.msra.mxu0 0
    %111 = vmatpush.bf16.msra.mxu0 0
    %112 = vmatpush.bf16.msra.mxu0 0
    %113 = vmatpush.bf16.msra.mxu0 0
    %114 = vmatpush.bf16.msra.mxu0 0
    %115 = vmatpush.bf16.msra.mxu0 0
    %116 = vmatpush.bf16.msra.mxu0 %v103
    %117 = vmatpush.bf16.msra.mxu0 %v102
    %118 = vmatmul.bf16.gmra.mxu0 %v108
    %v119 = vpop.f32.mrf.mxu0
    %v120 = vadd.f32 %v92, %v119
    %v121 = vpop.f32.mrf.mxu0
    %122 = vdwg.mxu0
    %v123 = vmax.f32 %v120, 0.0
    %vm124 = vcmask 123904
    %125 = vst.msk [vmem:[#allocation2] sm:$0x3] %vm124, %v123
    // Predicated region
    $region30: #{tpu_custom_call.1} parent=1 // pred_check
      _
    $region31: #{tpu_custom_call.1} parent=1 // pred_check_branch
      %127 = sbr.rel (0) target = $region33
    $region32: #{tpu_custom_call.1} parent=1 // pred_region
      %129 = vsyncadd [#allocation3], 0
      %s131 = sshll.u32 [#allocation2], 4
      %s132 = int_to_ptr.vmem [resolvable:$true] %s131
      %s133 = sshll.u32 %s7, 4
      %s134 = int_to_ptr.hbm [resolvable:$true] %s133
      %136 = dma.vmem_to_hbm [thread:$0]  %s132, 32, %s134, [#allocation3]
    $region33: #{tpu_custom_call.1} parent=1 // pred_fallthru
      _
    // Predicated region
    $region34: #{tpu_custom_call.1} parent=1 // pred_check
      _
    $region35: #{tpu_custom_call.1} parent=1 // pred_check_branch
      %138 = sbr.rel (0) target = $region37
    $region36: #{tpu_custom_call.1} parent=1 // pred_region
      %140 = dma.done [#allocation3], 32
    $region37: #{tpu_custom_call.1} parent=1 // pred_fallthru
      _
    %141 = vsyncpa [#allocation3], 1

</llo_original>
